<compile_context>
chip_gen: v5e
topology: v5e:2x2
jax: 0.10.0
libtpu: 0.0.40
codegen_flags: <defaults>
</compile_context>

<pallas_src>
import functools

import jax
import jax.numpy as jnp
from jax.experimental import pallas as pl
from jax.experimental.pallas import tpu as pltpu


# ---------------------------------------------------------------------------
# Generation-aware VMEM budgeting.
# ---------------------------------------------------------------------------
_LIMIT_HEADROOM = 8 << 20      # always leave this much below physical VMEM for Mosaic internals
_BUDGET_HEADROOM = 16 << 20    # slack between our tile math and the requested vmem limit
_TILE_TARGET_HI = 8 << 20      # per-grid-step x-tile upper target (keeps streams overlapped)
_MIN_GRID_STEPS = 8            # >= 4 steps per TensorCore on v7x megacore
_RESIDENT_MIN_BYTES = 1 << 20  # single-buffer grid-invariant operands only when it matters


def _tpu_vmem_capacity_bytes() -> int:
    try:
        return int(pltpu.get_tpu_info().vmem_capacity_bytes)
    except Exception:
        return 64 << 20        # conservative fallback (v7x per-TensorCore VMEM)


def _budgets():
    cap = _tpu_vmem_capacity_bytes()
    limit_cap = max(32 << 20, cap - _LIMIT_HEADROOM)      # ~120 MiB v5e/v6e, ~56 MiB v7x
    tile_budget = max(24 << 20, cap - _BUDGET_HEADROOM)   # ~112 MiB v5e/v6e, ~48 MiB v7x
    return tile_budget, limit_cap


def _vmem_limit(tile_bytes: int, limit_cap: int) -> int:
    return int(min(limit_cap, max(tile_bytes + (4 << 20), 32 << 20)))


def _num_buffers(nbytes: int) -> int:
    """Grid-invariant operands: 1 buffer when large (VMEM saving is material), else default 2."""
    return 1 if nbytes >= _RESIDENT_MIN_BYTES else 2


def _maybe_resident_spec(block_shape, index_map, nbytes):
    """BlockSpec for a grid-invariant operand; single VMEM copy when it is big enough to care."""
    if _num_buffers(nbytes) == 1:
        try:
            return pl.BlockSpec(block_shape, index_map, pipeline_mode=pl.Buffered(1))
        except (TypeError, AttributeError):
            pass                                     # older jax: fall back to default buffering
    return pl.BlockSpec(block_shape, index_map)


def _pick_bblk(B: int, per_image_bytes: int, x_budget_bytes: int) -> int:
    """Images per grid step: largest divisor of B whose 2-in + 2-out pipeline buffers fit the
    budget, whose x-tile stays <= ~8 MiB, and which keeps >= min(8, B) grid steps (pipeline
    overlap + v7x megacore utilization)."""
    best = 1
    for d in range(1, B + 1):
        if B % d:
            continue
        if 4 * d * per_image_bytes > x_budget_bytes:          # double-buffered input + output
            continue
        if d > 1 and d * per_image_bytes > _TILE_TARGET_HI:
            continue
        if d > 1 and (B // d) < min(_MIN_GRID_STEPS, B):
            continue
        best = d
    return best


# ---------------------------------------------------------------------------
# Single-pass kernel: whole image(s) resident, pool + 1x1 conv + rescale fused.
# ---------------------------------------------------------------------------
def _single_pass_kernel(x_ref, wt_ref, b_ref, o_ref, *, inv_hw):
    # x_ref: (bblk, C, HW) native dtype; wt_ref: (C, C) f32 (pre-transposed); b_ref: (1, C) f32.
    x = x_ref[...]                                                    # stay in native dtype
    # f32-accumulating global average pool over the spatial (lane) axis -> (bblk, C).
    pooled = jnp.sum(x, axis=-1, dtype=jnp.float32) * inv_hw
    # 1x1 conv over channels for all bblk images at once: (bblk, C) @ (C, C) on the MXU.
    logits = jnp.dot(pooled, wt_ref[...], preferred_element_type=jnp.float32) + b_ref[...]
    attn = jax.nn.sigmoid(logits)                                     # (bblk, C) f32
    # Rescale in the input dtype (attn cast once; no full f32 copy of x).
    o_ref[...] = (x * attn[:, :, None].astype(x.dtype)).astype(o_ref.dtype)


def _single_pass(x_flat, wt, b_row, x_budget, limit_cap, fixed_bytes):
    B, C, HW = x_flat.shape
    itemsize = jnp.dtype(x_flat.dtype).itemsize
    per_image = C * HW * itemsize
    bblk = _pick_bblk(B, per_image, x_budget)
    tile_bytes = 4 * bblk * per_image + fixed_bytes

    return pl.pallas_call(
        functools.partial(_single_pass_kernel, inv_hw=1.0 / HW),
        out_shape=jax.ShapeDtypeStruct((B, C, HW), x_flat.dtype),
        grid_spec=pltpu.PrefetchScalarGridSpec(
            num_scalar_prefetch=0,
            grid=(B // bblk,),
            in_specs=[
                pl.BlockSpec((bblk, C, HW), lambda b: (b, 0, 0)),        # bblk images per step
                _maybe_resident_spec((C, C), lambda b: (0, 0), C * C * 4),   # fc weight^T
                _maybe_resident_spec((1, C), lambda b: (0, 0), C * 4),       # fc bias
            ],
            out_specs=pl.BlockSpec((bblk, C, HW), lambda b: (b, 0, 0)),
        ),
        compiler_params=pltpu.CompilerParams(
            dimension_semantics=("parallel",),
            vmem_limit_bytes=_vmem_limit(tile_bytes, limit_cap),
        ),
    )(x_flat, wt, b_row)


# ---------------------------------------------------------------------------
# Two-pass fallback (slab exceeds VMEM budget, mostly a v7x concern).
# Pass 1: per-image channel sums (pure streaming reduction, lane-dense output).
# XLA:    tiny (B,C) matmul + bias + sigmoid.
# Pass 2: broadcast rescale tiled over (B, HW).
# ---------------------------------------------------------------------------
def _pooled_sum_kernel(x_ref, sums_ref, acc_ref, *, hw, thw, needs_mask):
    # x_ref: (1, C, thw) native dtype; sums_ref: (1, 1, C) f32; acc_ref: (1, C) f32 scratch.
    h = pl.program_id(1)

    @pl.when(h == 0)
    def _():
        acc_ref[...] = jnp.zeros_like(acc_ref)

    x = x_ref[...]
    if needs_mask:
        # The last HW tile is clipped by the DMA; out-of-bounds lanes hold unspecified VMEM
        # contents, so select them to zero before accumulating.
        lane = jax.lax.broadcasted_iota(jnp.int32, x.shape, 2)
        x = jnp.where(h * thw + lane < hw, x, jnp.zeros_like(x))
    acc_ref[...] += jnp.sum(x, axis=-1, dtype=jnp.float32)           # (1, C) f32

    @pl.when(h == pl.num_programs(1) - 1)
    def _():
        sums_ref[...] = acc_ref[...][:, None, :]                     # lane-dense (1, 1, C)


def _scale_kernel(x_ref, attn_ref, o_ref):
    # x_ref: (1, C, thw) native dtype; attn_ref: (1, C, 1) f32 (lane-broadcast read).
    x = x_ref[...]
    o_ref[...] = (x * attn_ref[...].astype(x.dtype)).astype(o_ref.dtype)


def _two_pass(x_flat, wt, b_row, tile_budget, limit_cap, max_tile_lanes=None):
    B, C, HW = x_flat.shape
    dtype = x_flat.dtype
    itemsize = jnp.dtype(dtype).itemsize

    # HW lane tile: multiple of 128, <= ~8 MiB, small enough for pass 2's 2-in + 2-out buffers.
    budget_cap = max(128, tile_budget // (4 * C * itemsize))
    target_cap = max(512, _TILE_TARGET_HI // (C * itemsize))
    thw = min(HW, budget_cap, target_cap)
    if max_tile_lanes is not None:
        thw = min(thw, max_tile_lanes)
    thw = max(128, (thw // 128) * 128)
    nhw = pl.cdiv(HW, thw)
    needs_mask = (HW % thw) != 0

    # Pass 1: per-image f32 channel sums, accumulated over HW tiles (reduction axis last).
    p1_bytes = 2 * C * thw * itemsize + 4 * C * 4
    sums = pl.pallas_call(
        functools.partial(_pooled_sum_kernel, hw=HW, thw=thw, needs_mask=needs_mask),
        out_shape=jax.ShapeDtypeStruct((B, 1, C), jnp.float32),
        grid_spec=pltpu.PrefetchScalarGridSpec(
            num_scalar_prefetch=0,
            grid=(B, nhw),
            in_specs=[pl.BlockSpec((1, C, thw), lambda b, h: (b, 0, h))],
            out_specs=pl.BlockSpec((1, 1, C), lambda b, h: (b, 0, 0)),
            scratch_shapes=[pltpu.VMEM((1, C), jnp.float32)],
        ),
        compiler_params=pltpu.CompilerParams(
            dimension_semantics=("parallel", "arbitrary"),
            vmem_limit_bytes=_vmem_limit(p1_bytes, limit_cap),
        ),
    )(x_flat)

    # Microscopic per-image channel mix in plain XLA (no weight residency in either kernel).
    pooled = sums[:, 0, :] * (1.0 / HW)                               # (B, C) f32
    attn = jax.nn.sigmoid(pooled @ wt + b_row)                        # (B, C) f32
    attn = attn[:, :, None]                                           # (B, C, 1)

    # Pass 2: broadcast rescale; both axes parallel (megacore). The ragged last HW tile relies
    # on clipped out-of-bounds writes, so no padding and no trailing slice.
    p2_bytes = 4 * C * thw * itemsize + 2 * C * 4
    return pl.pallas_call(
        _scale_kernel,
        out_shape=jax.ShapeDtypeStruct((B, C, HW), dtype),
        grid_spec=pltpu.PrefetchScalarGridSpec(
            num_scalar_prefetch=0,
            grid=(B, nhw),
            in_specs=[
                pl.BlockSpec((1, C, thw), lambda b, h: (b, 0, h)),
                pl.BlockSpec((1, C, 1), lambda b, h: (b, 0, 0)),
            ],
            out_specs=pl.BlockSpec((1, C, thw), lambda b, h: (b, 0, h)),
        ),
        compiler_params=pltpu.CompilerParams(
            dimension_semantics=("parallel", "parallel"),
            vmem_limit_bytes=_vmem_limit(p2_bytes, limit_cap),
        ),
    )(x_flat, attn)


# ---------------------------------------------------------------------------
# Public wrapper.
# ---------------------------------------------------------------------------
def channel_attention(x, weight, bias, *, force_two_pass=False, _max_tile_lanes=None):
    """x: (B, C, H, W); weight: (C, C) [nn.Conv2d(C, C, 1) weight squeezed]; bias: (C,)."""
    B, C, H, W = x.shape
    HW = H * W
    x_flat = x.reshape(B, C, HW)
    # Pre-transpose the 1x1-conv weight so the kernels compute pooled(B, C) @ W^T directly.
    wt = jnp.asarray(weight).reshape(C, C).T.astype(jnp.float32)
    b_row = jnp.asarray(bias).reshape(1, C).astype(jnp.float32)

    tile_budget, limit_cap = _budgets()
    itemsize = jnp.dtype(x.dtype).itemsize
    per_image = C * HW * itemsize
    # Weight/bias residency (padded to sublanes) + Mosaic compiler headroom, counted against
    # the single-pass budget so large-C configs cannot blow past v7x's VMEM.
    weight_bytes = C * C * 4
    bias_bytes = 8 * C * 4
    fixed_bytes = (_num_buffers(weight_bytes) * weight_bytes
                   + _num_buffers(bias_bytes) * bias_bytes + (2 << 20))
    x_budget = tile_budget - fixed_bytes

    # NOTE(v7x, B == 1): the fused path then runs a 1-step grid (one TensorCore); the two-pass
    # rescale parallelizes over HW but costs 1.5x HBM traffic, so the fused path is kept.
    if not force_two_pass and 4 * per_image <= x_budget:
        out_flat = _single_pass(x_flat, wt, b_row, x_budget, limit_cap, fixed_bytes)
    else:
        out_flat = _two_pass(x_flat, wt, b_row, tile_budget, limit_cap, _max_tile_lanes)

    return out_flat.reshape(B, C, H, W)


def _reference(x, weight, bias):
    pooled = jnp.mean(x, axis=(2, 3), keepdims=True)                  # (B, C, 1, 1)
    fc = jnp.einsum("oc,bcxy->boxy", weight, pooled) + bias[None, :, None, None]
    return x * jax.nn.sigmoid(fc)


if __name__ == "__main__":
    key = jax.random.PRNGKey(0)
    kx, kw, kb = jax.random.split(key, 3)

    # Fused single-pass path (what real workloads hit unless the slab exceeds VMEM).
    B, C, H, W = 2, 4, 16, 16
    x = jax.random.normal(kx, (B, C, H, W), dtype=jnp.float32)
    # nn.Conv2d(C, C, 1, bias=True) -> weight (C, C, 1, 1) squeezed to (C, C), bias (C,).
    weight = jax.random.normal(kw, (C, C), dtype=jnp.float32) * 0.1
    bias = jax.random.normal(kb, (C,), dtype=jnp.float32) * 0.1
    out = channel_attention(x, weight, bias)
    jax.block_until_ready(out)
    assert jnp.allclose(out, _reference(x, weight, bias), atol=1e-5, rtol=1e-5), \
        "single-pass mismatch vs reference"

    # Two-pass fallback with HW-tiled accumulation (HW divisible by the tile).
    out2 = channel_attention(x, weight, bias, force_two_pass=True, _max_tile_lanes=128)
    jax.block_until_ready(out2)
    assert jnp.allclose(out2, _reference(x, weight, bias), atol=1e-5, rtol=1e-5), \
        "two-pass mismatch vs reference"

    # Two-pass fallback with a ragged HW tile (HW=100 < 128): masked reduction + clipped writes.
    k2x, k2w, k2b = jax.random.split(jax.random.PRNGKey(1), 3)
    B2, C2, H2, W2 = 2, 8, 10, 10
    x2 = jax.random.normal(k2x, (B2, C2, H2, W2), dtype=jnp.float32)
    w2 = jax.random.normal(k2w, (C2, C2), dtype=jnp.float32) * 0.1
    b2 = jax.random.normal(k2b, (C2,), dtype=jnp.float32) * 0.1
    out3 = channel_attention(x2, w2, b2, force_two_pass=True, _max_tile_lanes=128)
    jax.block_until_ready(out3)
    assert jnp.allclose(out3, _reference(x2, w2, b2), atol=1e-5, rtol=1e-5), \
        "two-pass (ragged HW) mismatch vs reference"

    # Fused path with >1 image per grid step (batch blocking keeps >= 8 grid steps).
    k3x, k3w, k3b = jax.random.split(jax.random.PRNGKey(2), 3)
    B3, C3, H3, W3 = 16, 4, 4, 4
    x3 = jax.random.normal(k3x, (B3, C3, H3, W3), dtype=jnp.float32)
    w3 = jax.random.normal(k3w, (C3, C3), dtype=jnp.float32) * 0.1
    b3 = jax.random.normal(k3b, (C3,), dtype=jnp.float32) * 0.1
    out4 = channel_attention(x3, w3, b3)
    jax.block_until_ready(out4)
    assert jnp.allclose(out4, _reference(x3, w3, b3), atol=1e-5, rtol=1e-5), \
        "batch-blocked single-pass mismatch vs reference"

    print("KERNEL_OK")
</pallas_src>

<mosaic_0001>
module attributes {stable_mosaic.version = 11 : i64} {
  func.func @_single_pass_kernel(%arg0: i32, %arg1: memref<1x4x256xf32, #tpu.memory_space<vmem>>, %arg2: memref<4x4xf32, #tpu.memory_space<vmem>>, %arg3: memref<1x4xf32, #tpu.memory_space<vmem>>, %arg4: memref<1x4x256xf32, #tpu.memory_space<vmem>>) attributes {dimension_semantics = [#tpu.dimension_semantics<parallel>], iteration_bounds = array<i64: 2>, scalar_prefetch = 0 : i64, scratch_operands = 0 : i64, tpu.core_type = #tpu.core_type<tc>, window_params = [{transform_indices = @transform_0, window_bounds = array<i64: 1, 4, 256>}, {pipeline_mode = #tpu.pipeline_mode<synchronous>, transform_indices = @transform_1, window_bounds = array<i64: 4, 4>}, {pipeline_mode = #tpu.pipeline_mode<synchronous>, transform_indices = @transform_2, window_bounds = array<i64: 1, 4>}, {transform_indices = @transform_3, window_bounds = array<i64: 1, 4, 256>}]} {
    %c0 = arith.constant 0 : index
    %c0_0 = arith.constant 0 : index
    %c0_1 = arith.constant 0 : index
    %0 = vector.load %arg1[%c0, %c0_0, %c0_1] : memref<1x4x256xf32, #tpu.memory_space<vmem>>, vector<1x4x256xf32>
    %cst = arith.constant dense<0.000000e+00> : vector<1x4xf32>
    %1 = vector.multi_reduction <add>, %0, %cst [2] : vector<1x4x256xf32> to vector<1x4xf32>
    %cst_2 = arith.constant 3.906250e-03 : f32
    %2 = vector.broadcast %cst_2 : f32 to vector<1x4xf32>
    %3 = arith.mulf %1, %2 : vector<1x4xf32>
    %c0_3 = arith.constant 0 : index
    %c0_4 = arith.constant 0 : index
    %4 = vector.load %arg2[%c0_3, %c0_4] : memref<4x4xf32, #tpu.memory_space<vmem>>, vector<4x4xf32>
    %cst_5 = arith.constant dense<0.000000e+00> : vector<1x4xf32>
    %5 = tpu.matmul %3, %4, %cst_5 {dimension_numbers = #tpu.dot_dimension_numbers<[1], [0], [0], [1], [0, 0, 1, 1], [], []>} : vector<1x4xf32>, vector<4x4xf32>, vector<1x4xf32> -> vector<1x4xf32>
    %c0_6 = arith.constant 0 : index
    %c0_7 = arith.constant 0 : index
    %6 = vector.load %arg3[%c0_6, %c0_7] : memref<1x4xf32, #tpu.memory_space<vmem>>, vector<1x4xf32>
    %7 = arith.addf %5, %6 : vector<1x4xf32>
    %8 = arith.negf %7 : vector<1x4xf32>
    %9 = math.exp %8 : vector<1x4xf32>
    %cst_8 = arith.constant 1.000000e+00 : f32
    %10 = vector.broadcast %cst_8 : f32 to vector<1x4xf32>
    %11 = arith.addf %10, %9 : vector<1x4xf32>
    %12 = arith.divf %10, %11 : vector<1x4xf32>
    %13 = vector.shape_cast %12 : vector<1x4xf32> to vector<1x4x1xf32>
    %14 = vector.broadcast %13 : vector<1x4x1xf32> to vector<1x4x256xf32>
    %15 = arith.mulf %0, %14 : vector<1x4x256xf32>
    %c0_9 = arith.constant 0 : index
    %c0_10 = arith.constant 0 : index
    %c0_11 = arith.constant 0 : index
    %16 = vector.load %arg4[%c0_9, %c0_10, %c0_11] : memref<1x4x256xf32, #tpu.memory_space<vmem>>, vector<1x4x256xf32>
    tpu.vector_store %arg4[%c0_9, %c0_10, %c0_11], %15 {strides = array<i32>} : memref<1x4x256xf32, #tpu.memory_space<vmem>>, vector<1x4x256xf32>,
    return
  }
  func.func @transform_0(%arg0: i32) -> (i32, i32, i32) {
    %c0_i32 = arith.constant 0 : i32
    %c0_i32_0 = arith.constant 0 : i32
    %c0_i32_1 = arith.constant 0 : i32
    return %arg0, %c0_i32, %c0_i32_0 : i32, i32, i32
  }
  func.func @transform_1(%arg0: i32) -> (i32, i32) {
    %c0_i32 = arith.constant 0 : i32
    %c0_i32_0 = arith.constant 0 : i32
    %c0_i32_1 = arith.constant 0 : i32
    return %c0_i32, %c0_i32_0 : i32, i32
  }
  func.func @transform_2(%arg0: i32) -> (i32, i32) {
    %c0_i32 = arith.constant 0 : i32
    %c0_i32_0 = arith.constant 0 : i32
    %c0_i32_1 = arith.constant 0 : i32
    return %c0_i32, %c0_i32_0 : i32, i32
  }
  func.func @transform_3(%arg0: i32) -> (i32, i32, i32) {
    %c0_i32 = arith.constant 0 : i32
    %c0_i32_0 = arith.constant 0 : i32
    %c0_i32_1 = arith.constant 0 : i32
    return %arg0, %c0_i32, %c0_i32_0 : i32, i32, i32
  }
}

</mosaic_0001>

<llo_original>
// kernel: tpu_custom_call.1
$region0: #{tpu_custom_call.1}
  #allocation0 [shape = 'u32[]', space=smem, size = 0x4, offset = 0x4, fixed_abs, tag = 'smem constant byte address 0x4 - core index']
  #allocation1 [shape = 'u32[72,128]{1,0:T(1,128)}', space=vmem, size = 0x9000, scoped, tag = 'internal scratch']
  %s0 = inlined_call_operand.hbm [shape: f32[2,4,256], index: 0, kind: input, shape index: {}]
  %s1 = inlined_call_operand.hbm [shape: f32[4,4], index: 1, kind: input, shape index: {}]
  %s2 = inlined_call_operand.vmem [shape: f32[1,4], index: 2, kind: input, shape index: {}]
  %s3 = inlined_call_operand.hbm [shape: f32[2,4,256], index: 3, kind: output, shape index: {}]
  %s4 = sld [smem:[#allocation0]]
  $region53: #{tpu_custom_call.1} parent=0
    _
  %s6 = ssub.s32 1, %s4
  %s7 = scalar_select 0, %s6, %s4
  $region1: #{tpu_custom_call.1} parent=0
    #allocation2 [shape = 'u8[8192]{0}', space=vmem, size = 0x2000, scoped, tag = 'input window, operand 0']
    #allocation3 [shape = 's32[2]{0}', space=sflag, size = 0x8, scoped, tag = 'scoped memory for tpu_custom_call.1']
    #allocation4 [shape = 's32[2]{0}', space=sflag, size = 0x8, scoped, tag = 'scoped memory for tpu_custom_call.1']
    #allocation5 [shape = 'u8[2048]{0}', space=vmem, size = 0x800, scoped, tag = 'input window, operand 1, single buffered']
    #allocation6 [shape = 's32[1]{0}', space=sflag, size = 0x4, scoped, tag = 'scoped memory for tpu_custom_call.1']
    #allocation7 [shape = 'u8[8192]{0}', space=vmem, size = 0x2000, scoped, tag = 'output window, operand 0']
    %8 = vsyncpa [#allocation3], 0
    %s9 = scalar_lea.sflag [#allocation3], 1
    %10 = vsyncpa %s9, 0
    %11 = vsyncpa [#allocation6], 0
    %12 = vsyncpa [#allocation4], 0
    %s13 = scalar_lea.sflag [#allocation4], 1
    %14 = vsyncpa %s13, 0
    loop: start=0, step=1, limit=4
    $region2: #{tpu_custom_call.1} parent=1 // loop_pre_header
      _
    $region3: #{tpu_custom_call.1} parent=1 // loop_header
      %s16 = sphi 0, %s20
      %p17 = scmp.ge.s32.totalorder %s16, 4
      %s26 = sphi 0, %s28
      %s29 = sphi 0, %s26
      %s30 = sphi 0, %s29
      %s46 = sphi 0, %s30
      %s50 = sphi 0, %s50
      %s52 = sphi 0, %s50
      %s53 = sphi 0, %s52
      %s67 = sphi 0, %s53
      %s71 = sphi 0, %s71
      %s73 = sphi 0, %s71
      %s74 = sphi 0, %s73
      %s88 = sphi 0, %s74
      %s94 = sphi 0, %s96
      %s97 = sphi 0, %s94
      %s98 = sphi 0, %s97
      %s114 = sphi 0, %s98
    $region4: #{tpu_custom_call.1} parent=1 // loop_header_branch
      %19 = sbr.rel (%p17) target = $region8
    $region5: #{tpu_custom_call.1} parent=1 // loop_body
      %s21 = ssub.s32 %s16, 1
      %s22 = ssub.s32 %s16, 2
      %s23 = sadd.s32 %s16, 1
      %s24 = ssub.s32 %s16, %s23
      %p25 = scmp.eq.s32.totalorder %s24, 0
      %s27 = sadd.s32 %s26, 1
      %s28 = scalar_select %p25, %s26, %s27
      %p31 = pneg %p25
      %p32 = scmp.eq.s32.totalorder %s16, 1
      %p33 = por %p31, %p32
      %p34 = scmp.ne.s32.totalorder %s26, %s29
      %p35 = scmp.eq.s32.totalorder %s16, 0
      %p36 = por %p34, %p35
      %p37 = scmp.ne.s32.totalorder %s26, %s29
      %p38 = scmp.eq.s32.totalorder %s21, 1
      %p39 = por %p37, %p38
      %p40 = scmp.ne.s32.totalorder %s29, %s30
      %p41 = scmp.eq.s32.totalorder %s21, 0
      %p42 = por %p40, %p41
      %p43 = scmp.ne.s32.totalorder %s29, %s30
      %p44 = scmp.eq.s32.totalorder %s22, 1
      %p45 = por %p43, %p44
      %p47 = scmp.ne.s32.totalorder %s30, %s46
      %p48 = scmp.eq.s32.totalorder %s22, 0
      %p49 = por %p47, %p48
      %s51 = sadd.s32 %s50, 1
      %p54 = scmp.eq.s32.totalorder %s16, 1
      %p55 = scmp.ne.s32.totalorder %s50, %s52
      %p56 = scmp.eq.s32.totalorder %s16, 0
      %p57 = por %p55, %p56
      %p58 = scmp.ne.s32.totalorder %s50, %s52
      %p59 = scmp.eq.s32.totalorder %s21, 1
      %p60 = por %p58, %p59
      %p61 = scmp.ne.s32.totalorder %s52, %s53
      %p62 = scmp.eq.s32.totalorder %s21, 0
      %p63 = por %p61, %p62
      %p64 = scmp.ne.s32.totalorder %s52, %s53
      %p65 = scmp.eq.s32.totalorder %s22, 1
      %p66 = por %p64, %p65
      %p68 = scmp.ne.s32.totalorder %s53, %s67
      %p69 = scmp.eq.s32.totalorder %s22, 0
      %p70 = por %p68, %p69
      %s72 = sadd.s32 %s71, 1
      %p75 = scmp.eq.s32.totalorder %s16, 1
      %p76 = scmp.ne.s32.totalorder %s71, %s73
      %p77 = scmp.eq.s32.totalorder %s16, 0
      %p78 = por %p76, %p77
      %p79 = scmp.ne.s32.totalorder %s71, %s73
      %p80 = scmp.eq.s32.totalorder %s21, 1
      %p81 = por %p79, %p80
      %p82 = scmp.ne.s32.totalorder %s73, %s74
      %p83 = scmp.eq.s32.totalorder %s21, 0
      %p84 = por %p82, %p83
      %p85 = scmp.ne.s32.totalorder %s73, %s74
      %p86 = scmp.eq.s32.totalorder %s22, 1
      %p87 = por %p85, %p86
      %p89 = scmp.ne.s32.totalorder %s74, %s88
      %p90 = scmp.eq.s32.totalorder %s22, 0
      %p91 = por %p89, %p90
      %s92 = ssub.s32 %s16, %s23
      %p93 = scmp.eq.s32.totalorder %s92, 0
      %s95 = sadd.s32 %s94, 1
      %s96 = scalar_select %p93, %s94, %s95
      %p99 = pneg %p93
      %p100 = scmp.eq.s32.totalorder %s16, 1
      %p101 = por %p99, %p100
      %p102 = scmp.ne.s32.totalorder %s94, %s97
      %p103 = scmp.eq.s32.totalorder %s16, 0
      %p104 = por %p102, %p103
      %p105 = scmp.ne.s32.totalorder %s94, %s97
      %p106 = scmp.eq.s32.totalorder %s21, 1
      %p107 = por %p105, %p106
      %p108 = scmp.ne.s32.totalorder %s97, %s98
      %p109 = scmp.eq.s32.totalorder %s21, 0
      %p110 = por %p108, %p109
      %p111 = scmp.ne.s32.totalorder %s97, %s98
      %p112 = scmp.eq.s32.totalorder %s22, 1
      %p113 = por %p111, %p112
      %p115 = scmp.ne.s32.totalorder %s98, %s114
      %p116 = scmp.eq.s32.totalorder %s22, 0
      %p117 = por %p115, %p116
      %p118 = scmp.le.s32.totalorder 1, %s16
      %p119 = scmp.lt.s32.totalorder %s16, 3
      %p120 = pnand %p118, %p119
      %p121 = pneg %p120
      // Predicated region
      $region9: #{tpu_custom_call.1} parent=5 // pred_check
        _
      $region10: #{tpu_custom_call.1} parent=5 // pred_check_branch
        %123 = sbr.rel (%p120) target = $region12
      $region11: #{tpu_custom_call.1} parent=5 // pred_region
        %s124 = ssub.s32 %s16, 1
        // Predicated region
        $region13: #{tpu_custom_call.1} parent=11 // pred_check
          %p125 = pneg %p63
        $region14: #{tpu_custom_call.1} parent=11 // pred_check_branch
          %127 = sbr.rel (%p125) target = $region16
        $region15: #{tpu_custom_call.1} parent=11 // pred_region
          %129 = vsyncadd [#allocation6], 0
          %s131 = sshll.u32 %s1, 4
          %s132 = int_to_ptr.hbm [resolvable:$true] %s131
          %s133 = sshll.u32 [#allocation5], 4
          %s134 = int_to_ptr.vmem [resolvable:$true] %s133
          %136 = dma.hbm_to_vmem [thread:$0]  %s132, 64, %s134, [#allocation6]
        $region16: #{tpu_custom_call.1} parent=11 // pred_fallthru
          _
        // Predicated region
        $region17: #{tpu_custom_call.1} parent=11 // pred_check
          %p137 = pneg %p84
        $region18: #{tpu_custom_call.1} parent=11 // pred_check_branch
          %139 = sbr.rel (%p137) target = $region20
        $region19: #{tpu_custom_call.1} parent=11 // pred_region
          _
        $region20: #{tpu_custom_call.1} parent=11 // pred_fallthru
          _
      $region12: #{tpu_custom_call.1} parent=5 // pred_fallthru
        _
      %p140 = scmp.lt.s32.totalorder %s16, 2
      // Predicated region
      $region21: #{tpu_custom_call.1} parent=5 // pred_check
        %p141 = pneg %p140
      $region22: #{tpu_custom_call.1} parent=5 // pred_check_branch
        %143 = sbr.rel (%p141) target = $region24
      $region23: #{tpu_custom_call.1} parent=5 // pred_region
        // Predicated region
        $region25: #{tpu_custom_call.1} parent=23 // pred_check
          %p144 = pneg %p36
        $region26: #{tpu_custom_call.1} parent=23 // pred_check_branch
          %146 = sbr.rel (%p144) target = $region28
        $region27: #{tpu_custom_call.1} parent=23 // pred_region
          %s147 = sand.u32 %s26, 1
          %s148 = scalar_lea.sflag [#allocation3], %s147
          %s149 = sand.u32 %s26, 1
          %s150 = smul.addr %s149, 8
          %s151 = scalar_lea.vmem [#allocation2], %s150
          %153 = vsyncadd %s148, 0
          %s154 = smul.addr %s16, 2
          %s155 = smul.addr %s154, 4
          %s156 = scalar_lea.hbm %s0, %s155
          %s158 = sshll.u32 %s156, 4
          %s159 = int_to_ptr.hbm [resolvable:$true] %s158
          %s160 = sshll.u32 %s151, 4
          %s161 = int_to_ptr.vmem [resolvable:$true] %s160
          %163 = dma.hbm_to_vmem [thread:$0]  %s159, 128, %s161, %s148
        $region28: #{tpu_custom_call.1} parent=23 // pred_fallthru
          _
      $region24: #{tpu_custom_call.1} parent=5 // pred_fallthru
        _
      %p164 = scmp.le.s32.totalorder 1, %s16
      %p165 = scmp.lt.s32.totalorder %s16, 3
      %p166 = pnand %p164, %p165
      %p167 = pneg %p166
      // Predicated region
      $region29: #{tpu_custom_call.1} parent=5 // pred_check
        _
      $region30: #{tpu_custom_call.1} parent=5 // pred_check_branch
        %169 = sbr.rel (%p166) target = $region32
      $region31: #{tpu_custom_call.1} parent=5 // pred_region
        %s170 = ssub.s32 %s16, 1
        %s171 = sand.u32 %s29, 1
        %s172 = scalar_lea.sflag [#allocation3], %s171
        %s173 = sand.u32 %s29, 1
        %s174 = smul.addr %s173, 8
        %s175 = scalar_lea.vmem [#allocation2], %s174
        // Predicated region
        $region33: #{tpu_custom_call.1} parent=31 // pred_check
          %p176 = pneg %p42
        $region34: #{tpu_custom_call.1} parent=31 // pred_check_branch
          %178 = sbr.rel (%p176) target = $region36
        $region35: #{tpu_custom_call.1} parent=31 // pred_region
          %180 = dma.done %s172, 128
        $region36: #{tpu_custom_call.1} parent=31 // pred_fallthru
          _
        // Predicated region
        $region37: #{tpu_custom_call.1} parent=31 // pred_check
          %p181 = pneg %p63
        $region38: #{tpu_custom_call.1} parent=31 // pred_check_branch
          %183 = sbr.rel (%p181) target = $region40
        $region39: #{tpu_custom_call.1} parent=31 // pred_region
          %185 = dma.done [#allocation6], 64
        $region40: #{tpu_custom_call.1} parent=31 // pred_fallthru
          _
        %s186 = sand.u32 %s29, 1
        %s187 = scalar_lea.sflag [#allocation3], %s186
        %s188 = sand.u32 %s29, 1
        %s189 = smul.addr %s188, 8
        %s190 = scalar_lea.vmem [#allocation2], %s189
        %p191 = pneg %p42
        %p192 = pneg %p39
        %p193 = pneg %p63
        %p194 = pneg %p60
        %p195 = pneg %p84
        %p196 = pneg %p81
        %p197 = pneg %p110
        %p198 = pneg %p107
        %s199 = sand.u32 %s97, 1
        %s200 = scalar_lea.sflag [#allocation4], %s199
        %s201 = sand.u32 %s97, 1
        %s202 = smul.addr %s201, 8
        %s203 = scalar_lea.vmem [#allocation7], %s202
        %v204 = vld [vmem:[%s175] sm:$0xff]
        %206 = vst [vmem:[#allocation1] ss:$2 sm:$0xff] %v204
        %v207 = vld.sshfl [vmem:[#allocation1] sm:$0xff pattern:$0x75316420]
        %v208 = vld.sshfl [vmem:[#allocation1 + $0x8] sm:$0xff pattern:$0x75316420]
        %vm211 = vcmask 1043456
        %v212 = vsel %vm211, %v207, 0.0
        %v213 = vsel %vm211, %v208, 0.0
        %v214 = vadd.f32 %v212, %v213
        %215 = vadd.xlane.f32.xlu0 %v214
        %v216 = vpop.xlane.xlu0 %215
        %v217 = vmul.f32 %v216, 0.00390625
        %v218 = vld [vmem:[#allocation5] sm:$0xf]
        %v219 = vld [vmem:[%s2] sm:$0x1]
        %v221 = vlaneseq
        %v222 = vand.u32 %v221, 127
        %v223 = vperm.slane %v217, %v222
        %vm224 = vcmask 31744
        %v225 = vsel %vm224, %v223, 0
        %v228 = vsel %vm211, %v218, 0
        %230 = vmatpush.msra.mxu0 0.0
        %231 = vmatpush.msra.mxu0 0.0
        %232 = vmatpush.msra.mxu0 0.0
        %233 = vmatpush.msra.mxu0 0.0
        %234 = vmatpush.msra.mxu0 0.0
        %235 = vmatpush.msra.mxu0 0.0
        %236 = vmatpush.msra.mxu0 0.0
        %237 = vmatpush.msra.mxu0 0.0
        %238 = vmatpush.msra.mxu0 0.0
        %239 = vmatpush.msra.mxu0 0.0
        %240 = vmatpush.msra.mxu0 0.0
        %241 = vmatpush.msra.mxu0 0.0
        %242 = vmatpush.msra.mxu0 0.0
        %243 = vmatpush.msra.mxu0 0.0
        %244 = vmatpush.msra.mxu0 0.0
        %245 = vmatpush.msra.mxu0 %v228
        %246 = vmatmul.f32.gmra.mxu0 %v225
        %v247 = vpop.f32.mrf.mxu0
        %v248 = vadd.f32 %v219, %v247
        %249 = vdwg.mxu0
        %v250 = vxor.u32 %v248, 2147483648
        %v251 = vmul.f32 %v250, 1.442695
        %v252 = vpow.pop %v251
        %v253 = vadd.f32 %v252, 1.0
        %v254 = vrcp.pop %v253
        %v255 = vmul.f32 %v253, %v254
        %v256 = vsub.f32 1.0, %v255
        %v257 = vmul.f32 %v254, %v256
        %v258 = vadd.f32 %v254, %v257
        %vm259 = vweird.f32 %v253
        %vm260 = vweird.f32 %v254
        %vm261 = vmor %vm259, %vm260
        %v262 = vsel %vm261, %v254, %v258
        %v263 = vand.u32 2147483647, %v253
        %vm264 = vcmp.eq.f32.partialorder %v263, 8.507059e+37
        %v265 = vand.u32 %v253, 2147483648
        %v266 = vor.u32 1.1754944e-38, %v265
        %v267 = vsel %vm264, %v266, %v262
        %v268 = vmul.f32 1.0, %v267
        %v269 = vperm.slane %v268, 0
        %v270 = vlaneseq
        %v271 = vshrl.u32 %v270, 7
        %273 = vset.pattern.permute.xlu0 %v271
        %274 = vperm.xlu0 %273, %v269
        %v275 = vpop.permute.xlu0 %274
        %v278 = vunpack.c.l.s4 839922192
        %v279 = vunpack.c.0.s8 %v278
        %v280 = vperm.slane %v275, %v279
        %v282 = vmul.f32 %v204, %v280
        %283 = vst [vmem:[%s203] sm:$0xff] %v282
        %s284 = sand.u32 %s97, 1
        %s285 = scalar_lea.sflag [#allocation4], %s284
        %s286 = sand.u32 %s97, 1
        %s287 = smul.addr %s286, 8
        %s288 = scalar_lea.vmem [#allocation7], %s287
        // Predicated region
        $region41: #{tpu_custom_call.1} parent=31 // pred_check
          %p289 = pneg %p107
        $region42: #{tpu_custom_call.1} parent=31 // pred_check_branch
          %291 = sbr.rel (%p289) target = $region44
        $region43: #{tpu_custom_call.1} parent=31 // pred_region
          %293 = vsyncadd %s285, 0
          %s294 = smul.addr %s21, 2
          %s295 = smul.addr %s294, 4
          %s296 = scalar_lea.hbm %s3, %s295
          %s298 = sshll.u32 %s288, 4
          %s299 = int_to_ptr.vmem [resolvable:$true] %s298
          %s300 = sshll.u32 %s296, 4
          %s301 = int_to_ptr.hbm [resolvable:$true] %s300
          %303 = dma.vmem_to_hbm [thread:$0]  %s299, 128, %s301, %s285
        $region44: #{tpu_custom_call.1} parent=31 // pred_fallthru
          _
      $region32: #{tpu_custom_call.1} parent=5 // pred_fallthru
        _
      %p304 = scmp.le.s32.totalorder 2, %s16
      // Predicated region
      $region45: #{tpu_custom_call.1} parent=5 // pred_check
        %p305 = pneg %p304
      $region46: #{tpu_custom_call.1} parent=5 // pred_check_branch
        %307 = sbr.rel (%p305) target = $region48
      $region47: #{tpu_custom_call.1} parent=5 // pred_region
        %s308 = ssub.s32 %s16, 2
        // Predicated region
        $region49: #{tpu_custom_call.1} parent=47 // pred_check
          %p309 = pneg %p113
        $region50: #{tpu_custom_call.1} parent=47 // pred_check_branch
          %311 = sbr.rel (%p309) target = $region52
        $region51: #{tpu_custom_call.1} parent=47 // pred_region
          %s312 = sand.u32 %s98, 1
          %s313 = scalar_lea.sflag [#allocation4], %s312
          %s314 = sand.u32 %s98, 1
          %s315 = smul.addr %s314, 8
          %s316 = scalar_lea.vmem [#allocation7], %s315
          %318 = dma.done %s313, 128
        $region52: #{tpu_custom_call.1} parent=47 // pred_fallthru
          _
      $region48: #{tpu_custom_call.1} parent=5 // pred_fallthru
        _
    $region6: #{tpu_custom_call.1} parent=1 // loop_footer
      %s20 = sadd.s32 1, %s16
    $region7: #{tpu_custom_call.1} parent=1 // loop_footer_branch
      %15 = sbr.rel target = $region3
    $region8: #{tpu_custom_call.1} parent=1 // loop_exit
      _
    %319 = vsyncpa [#allocation3], 1
    %s320 = scalar_lea.sflag [#allocation3], 1
    %321 = vsyncpa %s320, 1
    %322 = vsyncpa [#allocation6], 1
    %323 = vsyncpa [#allocation4], 1
    %s324 = scalar_lea.sflag [#allocation4], 1
    %325 = vsyncpa %s324, 1

</llo_original>
